<compile_context>
chip_gen: v6e
topology: v6e:2x2x1
jax: 0.10.0
libtpu: 0.0.40
codegen_flags: <defaults>
</compile_context>

<pallas_src>
import functools
import math

import jax
import jax.numpy as jnp
from jax import lax
from jax.experimental import pallas as pl
from jax.experimental.pallas import tpu as pltpu


# ----------------------------------------------------------------------------
# helpers
# ----------------------------------------------------------------------------
def _layernorm(x, g, b, eps):
    mu = jnp.mean(x, axis=-1, keepdims=True)
    xc = x - mu
    var = jnp.mean(xc * xc, axis=-1, keepdims=True)
    return xc * lax.rsqrt(var + eps) * g + b


def _pick_row_tile(n_rows, target):
    """Largest row tile <= target that divides n_rows and is a sublane multiple."""
    if n_rows <= target:
        return n_rows
    t = (min(target, n_rows) // 8) * 8
    while t >= 8:
        if n_rows % t == 0:
            return t
        t -= 8
    # TODO(synk): no sublane-aligned divisor -> fall back to one full-size block; pad
    # rows upstream if a very large, odd B*T ever makes this blow the VMEM budget.
    return n_rows


def _pick_lane_tile(n, target):
    """Largest lane tile <= target that divides n and is a 128 multiple."""
    if n <= target:
        return n
    t = (min(target, n) // 128) * 128
    while t >= 128:
        if n % t == 0:
            return t
        t -= 128
    return n


@functools.lru_cache(maxsize=None)
def _chip_config():
    """Generation-aware (vmem_limit_bytes, default_block_rows)."""
    cap = None
    try:
        cap = getattr(pltpu.get_tpu_info(), "vmem_capacity_bytes", None)
    except Exception:
        cap = None
    if cap is not None and cap >= 100 * 1024 * 1024:        # v5e / v6e: 128 MiB VMEM
        return 96 * 1024 * 1024, 512
    return 40 * 1024 * 1024, 256                            # v7x (64 MiB) or unknown


@functools.lru_cache(maxsize=None)
def _single_buffer_supported():
    """Probe once whether BlockSpec(pipeline_mode=pl.Buffered(1)) works on this jax."""
    try:
        def _k(x_ref, o_ref):
            o_ref[...] = x_ref[...] + 1.0

        out = pl.pallas_call(
            _k, grid=(2,),
            in_specs=[pl.BlockSpec((8, 128), lambda i: (0, 0),
                                   pipeline_mode=pl.Buffered(1))],
            out_specs=pl.BlockSpec((8, 128), lambda i: (0, 0)),
            out_shape=jax.ShapeDtypeStruct((8, 128), jnp.float32),
        )(jnp.zeros((8, 128), jnp.float32))
        jax.block_until_ready(out)
        return True
    except Exception:
        return False


def _const_spec(shape, single_buffer):
    """BlockSpec for a weight whose block index never changes (re-fetch is skipped;
    Buffered(1) additionally drops the pointless second VMEM buffer when supported)."""
    zeros = (0,) * len(shape)
    if single_buffer:
        return pl.BlockSpec(shape, lambda *_: zeros, pipeline_mode=pl.Buffered(1))
    return pl.BlockSpec(shape, lambda *_: zeros)


# ----------------------------------------------------------------------------
# Kernel A: self-attention QKV projection, row-tiled, q/k/v as separate bf16 outputs
#           (softmax scale is pre-folded into the q columns of the weight)
# ----------------------------------------------------------------------------
def qkv_proj_kernel(x_ref, w_ref, q_ref, k_ref, v_ref):
    D = q_ref.shape[-1]
    qkv = jnp.dot(x_ref[...].astype(jnp.bfloat16), w_ref[...],
                  preferred_element_type=jnp.float32)              # (tm, 3D) f32
    q_ref[...] = qkv[:, :D].astype(jnp.bfloat16)
    k_ref[...] = qkv[:, D:2 * D].astype(jnp.bfloat16)
    v_ref[...] = qkv[:, 2 * D:].astype(jnp.bfloat16)


# ----------------------------------------------------------------------------
# Kernel B: self-attention SDPA in the module's "buggy" (b*heads, n, dh) view,
#           one (batch, q-row tile) per grid step; bf16 in, bf16 out
# ----------------------------------------------------------------------------
def self_attn_kernel(q_ref, k_ref, v_ref, o_ref, *, causal, q_tile):
    q = q_ref[...]                                  # (H, tq, dh) bf16, scale pre-folded
    k = k_ref[...]                                  # (H, T,  dh) bf16
    v = v_ref[...]                                  # (H, T,  dh) bf16
    s = jnp.einsum("htd,hsd->hts", q, k, preferred_element_type=jnp.float32)
    if causal:
        # TODO(synk): masking is applied inside the module's buggy head view (rows/cols
        # are not true sequence positions) -- matches the module literally, untested
        # against the PyTorch intent; the default path (causal=False) is exact.
        mshape = (1, s.shape[1], s.shape[2])
        row = lax.broadcasted_iota(jnp.int32, mshape, 1) + pl.program_id(1) * q_tile
        col = lax.broadcasted_iota(jnp.int32, mshape, 2)
        s = jnp.where(col <= row, s, -1e30)          # finite mask value (no NaN rows)
    m = jnp.max(s, axis=-1, keepdims=True)
    p = jnp.exp(s - m)
    p = p * pl.reciprocal(jnp.sum(p, axis=-1, keepdims=True), approx=True)
    o_ref[...] = jnp.einsum("hts,hsd->htd", p.astype(jnp.bfloat16), v,
                            preferred_element_type=jnp.float32).astype(jnp.bfloat16)


# ----------------------------------------------------------------------------
# Kernel C: self-attn out-proj + residual + norm1, cross-attention + residual
#           + norm2 -- one batch element per grid step
# ----------------------------------------------------------------------------
def attn_rest_kernel(x_ref, sa_ref, mem_ref,
                     w_sa_out_ref,                    # (D, D)     bf16
                     g1_ref, be1_ref,                 # (1, D)     f32
                     w_q_ref, w_k_ref, w_v_ref,       # (H, D, dh) bf16 (q pre-scaled)
                     b_q_ref, b_k_ref, b_v_ref,       # (H, 1, dh) f32  (q pre-scaled)
                     w_o_ref, b_o_ref,                # (H, dh, D) bf16, (1, D) f32
                     g2_ref, be2_ref,                 # (1, D)     f32
                     o_ref, *, num_heads, eps):
    x = x_ref[0]            # (T, D) f32   (tgt)
    sa_ctx = sa_ref[0]      # (T, D) bf16  (buggy-merged self-attn context)
    mem = mem_ref[0]        # (S, D) f32
    H = num_heads
    T, D = x.shape

    # --- self-attn output projection: ONE full-width (T,D)@(D,D) MXU matmul ---
    sa = jnp.dot(sa_ctx, w_sa_out_ref[...], preferred_element_type=jnp.float32)
    x1 = _layernorm(x + sa, g1_ref[...], be1_ref[...], eps)

    # --- cross attention (standard torch.nn.MultiheadAttention head split) ---
    x1b = x1.astype(jnp.bfloat16)
    memb = mem.astype(jnp.bfloat16)

    def _proj_heads(inp, w_ref, b_ref):
        # Head-major weights: per-head (rows, D)@(D, dh) matmuls, stacked along the
        # LEADING axis -- no lane-slicing of activations, no (8,128)-crossing shuffles.
        return jnp.stack(
            [(jnp.dot(inp, w_ref[h], preferred_element_type=jnp.float32)
              + b_ref[h]).astype(jnp.bfloat16) for h in range(H)], axis=0)

    qh = _proj_heads(x1b, w_q_ref, b_q_ref)     # (H, T, dh) bf16, scale pre-folded
    kh = _proj_heads(memb, w_k_ref, b_k_ref)    # (H, S, dh) bf16
    vh = _proj_heads(memb, w_v_ref, b_v_ref)    # (H, S, dh) bf16

    s = jnp.einsum("htd,hsd->hts", qh, kh, preferred_element_type=jnp.float32)
    m = jnp.max(s, axis=-1, keepdims=True)
    p = jnp.exp(s - m)
    p = p * pl.reciprocal(jnp.sum(p, axis=-1, keepdims=True), approx=True)
    ctx = jnp.einsum("hts,hsd->htd", p.astype(jnp.bfloat16), vh,
                     preferred_element_type=jnp.float32)                     # (H,T,dh) f32

    # out-projection: per-head accumulation into a single (T, D) f32 accumulator
    # (no (H, T, D) intermediate, no leading-axis VPU reduction).
    ctxb = ctx.astype(jnp.bfloat16)
    y = jnp.zeros((T, D), jnp.float32)
    for h in range(H):
        y = y + jnp.dot(ctxb[h], w_o_ref[h], preferred_element_type=jnp.float32)
    y = y + b_o_ref[...]

    o_ref[0] = _layernorm(x1 + y, g2_ref[...], be2_ref[...], eps)


# ----------------------------------------------------------------------------
# Kernel D: FFN (relu) + residual + norm3, row-tiled over B*T, DFF streamed over
#           an "arbitrary" grid axis with an f32 accumulator
# ----------------------------------------------------------------------------
def ffn_kernel(x_ref, w1_ref, b1_ref, w2_ref, b2_ref, g3_ref, be3_ref,
               o_ref, acc_ref, *, eps):
    j = pl.program_id(1)

    @pl.when(j == 0)
    def _():
        acc_ref[...] = jnp.zeros_like(acc_ref)

    x = x_ref[...]                                                       # (tm, D) f32
    h = jnp.dot(x.astype(jnp.bfloat16), w1_ref[...],
                preferred_element_type=jnp.float32) + b1_ref[...]        # (tm, tf)
    h = jnp.maximum(h, 0.0)
    acc_ref[...] += jnp.dot(h.astype(jnp.bfloat16), w2_ref[...],
                            preferred_element_type=jnp.float32)          # (tm, D)

    @pl.when(j == pl.num_programs(1) - 1)
    def _():
        o_ref[...] = _layernorm(x + acc_ref[...] + b2_ref[...],
                                g3_ref[...], be3_ref[...], eps)


# ----------------------------------------------------------------------------
# Wrapper (parameter packing + zero-cost reshapes in plain JAX)
# ----------------------------------------------------------------------------
def transformer_decoder_layer(tgt, memory, p, *, num_heads, eps=1e-5,
                              tgt_is_causal=False, block_rows=None, block_dff=1024):
    B, T, D = tgt.shape
    S = memory.shape[1]
    H = num_heads
    dh = D // H
    DFF = p["w1_t"].shape[1]
    BT = B * T
    scale = 1.0 / math.sqrt(dh)
    f32, bf16 = jnp.float32, jnp.bfloat16

    vmem_limit, default_rows = _chip_config()
    if block_rows is None:
        block_rows = default_rows
    single_buf = _single_buffer_supported()
    wspec = functools.partial(_const_spec, single_buffer=single_buf)

    # -- weight packing (wrapper-side, one-time): bf16 resident matmul weights, softmax
    #    scales folded into q projections, head-major cross-attn weights; biases / norm
    #    params stay f32 --
    w_qkv = jnp.concatenate([p["w_qkv_t"][:, :D] * scale, p["w_qkv_t"][:, D:]],
                            axis=1).astype(bf16)                       # (D, 3D)
    w_sa_out = p["w_sa_out_t"].astype(bf16)                            # (D, D)

    w_in, b_in = p["w_in_t"], p["b_in"][0]

    def _head_major(w2d):                                              # (D, D) -> (H, D, dh)
        return jnp.transpose(w2d.reshape(D, H, dh), (1, 0, 2))

    w_q_h = _head_major(w_in[:, :D] * scale).astype(bf16)
    w_k_h = _head_major(w_in[:, D:2 * D]).astype(bf16)
    w_v_h = _head_major(w_in[:, 2 * D:]).astype(bf16)
    b_q_h = (b_in[:D] * scale).reshape(H, 1, dh)
    b_k_h = b_in[D:2 * D].reshape(H, 1, dh)
    b_v_h = b_in[2 * D:].reshape(H, 1, dh)
    w_o_h = p["w_o_t"].reshape(H, dh, D).astype(bf16)                  # head-major out_proj

    w1 = p["w1_t"].astype(bf16)                                        # (D, DFF)
    w2 = p["w2_t"].astype(bf16)                                        # (DFF, D)

    tm = _pick_row_tile(BT, block_rows)
    tq = _pick_row_tile(T, block_rows)
    tf = _pick_lane_tile(DFF, block_dff)
    cparams = functools.partial(pltpu.CompilerParams, vmem_limit_bytes=vmem_limit)

    # ---- Kernel A: QKV projection (row-tiled, pipelined, 3 separate bf16 outputs) ----
    q, k, v = pl.pallas_call(
        qkv_proj_kernel,
        grid=(BT // tm,),
        in_specs=[pl.BlockSpec((tm, D), lambda i: (i, 0)),
                  wspec((D, 3 * D))],
        out_specs=(pl.BlockSpec((tm, D), lambda i: (i, 0)),
                   pl.BlockSpec((tm, D), lambda i: (i, 0)),
                   pl.BlockSpec((tm, D), lambda i: (i, 0))),
        out_shape=(jax.ShapeDtypeStruct((BT, D), bf16),
                   jax.ShapeDtypeStruct((BT, D), bf16),
                   jax.ShapeDtypeStruct((BT, D), bf16)),
        compiler_params=cparams(dimension_semantics=("parallel",)),
    )(tgt.reshape(BT, D), w_qkv)

    # Module's buggy `.contiguous().view(b, heads, n, -1)` head split: a raw
    # row-major reinterpretation -> a zero-cost reshape in HBM.
    q = q.reshape(B * H, T, dh)
    k = k.reshape(B * H, T, dh)
    v = v.reshape(B * H, T, dh)

    # ---- Kernel B: self-attention SDPA, (batch, q-row tile) grid, bf16 output ----
    sa_ctx = pl.pallas_call(
        functools.partial(self_attn_kernel, causal=tgt_is_causal, q_tile=tq),
        grid=(B, T // tq),
        in_specs=[pl.BlockSpec((H, tq, dh), lambda b, t: (b, t, 0)),
                  pl.BlockSpec((H, T, dh), lambda b, t: (b, 0, 0)),
                  pl.BlockSpec((H, T, dh), lambda b, t: (b, 0, 0))],
        out_specs=pl.BlockSpec((H, tq, dh), lambda b, t: (b, t, 0)),
        out_shape=jax.ShapeDtypeStruct((B * H, T, dh), bf16),
        compiler_params=cparams(dimension_semantics=("parallel", "parallel")),
    )(q, k, v)
    # inverse of the buggy view ((b*heads, n, dh) -> (b, n, d_model)); also free in HBM.
    sa_ctx = sa_ctx.reshape(B, T, D)

    # ---- Kernel C: out-proj + norm1 + cross-attention + norm2, per batch element ----
    in_specs = [
        pl.BlockSpec((1, T, D), lambda b: (b, 0, 0)),   # tgt (f32)
        pl.BlockSpec((1, T, D), lambda b: (b, 0, 0)),   # self-attn context (bf16)
        pl.BlockSpec((1, S, D), lambda b: (b, 0, 0)),   # memory (f32)
        wspec((D, D)),                                  # w_sa_out
        wspec((1, D)), wspec((1, D)),                   # norm1
        wspec((H, D, dh)), wspec((H, D, dh)), wspec((H, D, dh)),   # w_q/k/v (head-major)
        wspec((H, 1, dh)), wspec((H, 1, dh)), wspec((H, 1, dh)),   # b_q/k/v (head-major)
        wspec((H, dh, D)), wspec((1, D)),               # w_o (head-major), b_o
        wspec((1, D)), wspec((1, D)),                   # norm2
    ]
    x2 = pl.pallas_call(
        functools.partial(attn_rest_kernel, num_heads=H, eps=eps),
        grid=(B,),
        in_specs=in_specs,
        out_specs=pl.BlockSpec((1, T, D), lambda b: (b, 0, 0)),
        out_shape=jax.ShapeDtypeStruct((B, T, D), f32),
        compiler_params=cparams(dimension_semantics=("parallel",)),
    )(tgt, sa_ctx, memory,
      w_sa_out, p["g1"], p["be1"],
      w_q_h, w_k_h, w_v_h, b_q_h, b_k_h, b_v_h,
      w_o_h, p["b_o"], p["g2"], p["be2"])

    # ---- Kernel D: FFN + norm3 (row-tiled; DFF streamed over an 'arbitrary' axis) ----
    out = pl.pallas_call(
        functools.partial(ffn_kernel, eps=eps),
        grid=(BT // tm, DFF // tf),
        in_specs=[pl.BlockSpec((tm, D), lambda i, j: (i, 0)),
                  pl.BlockSpec((D, tf), lambda i, j: (0, j)),
                  pl.BlockSpec((1, tf), lambda i, j: (0, j)),
                  pl.BlockSpec((tf, D), lambda i, j: (j, 0)),
                  wspec((1, D)), wspec((1, D)), wspec((1, D))],
        out_specs=pl.BlockSpec((tm, D), lambda i, j: (i, 0)),
        out_shape=jax.ShapeDtypeStruct((BT, D), f32),
        scratch_shapes=[pltpu.VMEM((tm, D), jnp.float32)],
        compiler_params=cparams(dimension_semantics=("parallel", "arbitrary")),
    )(x2.reshape(BT, D), w1, p["b1"], w2, p["b2"], p["g3"], p["be3"])

    return out.reshape(B, T, D)


# ----------------------------------------------------------------------------
# Deterministic parameter init (shapes per the module __init__), master copies f32
# ----------------------------------------------------------------------------
def init_params(key, D, H, DFF):
    ks = jax.random.split(key, 12)

    def xavier(kk, out_f, in_f):
        bound = math.sqrt(6.0 / (in_f + out_f))
        return jax.random.uniform(kk, (out_f, in_f), jnp.float32, -bound, bound)

    w_qkv = xavier(ks[0], 3 * D, D)          # MultiHeadSelfAttention.to_qkv (no bias)
    w_sa_out = xavier(ks[1], D, D)           # MultiHeadSelfAttention.to_out (no bias)
    w_in = xavier(ks[2], 3 * D, D)           # MultiheadAttention.in_proj_weight
    b_in = 0.1 * jax.random.normal(ks[3], (3 * D,), jnp.float32)
    w_o = xavier(ks[4], D, D)                # MultiheadAttention.out_proj
    b_o = 0.1 * jax.random.normal(ks[5], (D,), jnp.float32)
    w1 = xavier(ks[6], DFF, D)               # linear1
    b1 = 0.1 * jax.random.normal(ks[7], (DFF,), jnp.float32)
    w2 = xavier(ks[8], D, DFF)               # linear2
    b2 = 0.1 * jax.random.normal(ks[9], (D,), jnp.float32)
    g = 1.0 + 0.05 * jax.random.normal(ks[10], (3, D), jnp.float32)   # norm weights
    be = 0.05 * jax.random.normal(ks[11], (3, D), jnp.float32)        # norm biases

    return dict(
        w_qkv_t=w_qkv.T, w_sa_out_t=w_sa_out.T,
        w_in_t=w_in.T, b_in=b_in.reshape(1, 3 * D),
        w_o_t=w_o.T, b_o=b_o.reshape(1, D),
        w1_t=w1.T, b1=b1.reshape(1, DFF),
        w2_t=w2.T, b2=b2.reshape(1, D),
        g1=g[0:1], be1=be[0:1], g2=g[1:2], be2=be[1:2], g3=g[2:3], be3=be[2:3],
    )


# ----------------------------------------------------------------------------
# Pure-JAX f32 reference (same math) for a correctness check
# ----------------------------------------------------------------------------
def reference(tgt, memory, p, *, num_heads, eps=1e-5):
    B, T, D = tgt.shape
    S = memory.shape[1]
    dh = D // num_heads

    def ln(x, g, b):
        mu = jnp.mean(x, -1, keepdims=True)
        var = jnp.mean((x - mu) ** 2, -1, keepdims=True)
        return (x - mu) / jnp.sqrt(var + eps) * g + b

    x = tgt
    qkv = x @ p["w_qkv_t"]
    q, k, v = jnp.split(qkv, 3, axis=-1)
    q = q.reshape(B, num_heads, T, dh)      # buggy head split
    k = k.reshape(B, num_heads, T, dh)
    v = v.reshape(B, num_heads, T, dh)
    a = jax.nn.softmax(jnp.einsum("bhtd,bhsd->bhts", q, k) / math.sqrt(dh), -1)
    sa = jnp.einsum("bhts,bhsd->bhtd", a, v).reshape(B, T, D) @ p["w_sa_out_t"]
    x = ln(x + sa, p["g1"][0], p["be1"][0])

    w_in, b_in = p["w_in_t"], p["b_in"][0]
    qc = x @ w_in[:, :D] + b_in[:D]
    kc = memory @ w_in[:, D:2 * D] + b_in[D:2 * D]
    vc = memory @ w_in[:, 2 * D:] + b_in[2 * D:]
    qh = qc.reshape(B, T, num_heads, dh).transpose(0, 2, 1, 3)
    kh = kc.reshape(B, S, num_heads, dh).transpose(0, 2, 1, 3)
    vh = vc.reshape(B, S, num_heads, dh).transpose(0, 2, 1, 3)
    a = jax.nn.softmax(jnp.einsum("bhtd,bhsd->bhts", qh, kh) / math.sqrt(dh), -1)
    ctx = jnp.einsum("bhts,bhsd->bhtd", a, vh).transpose(0, 2, 1, 3).reshape(B, T, D)
    x = ln(x + ctx @ p["w_o_t"] + p["b_o"][0], p["g2"][0], p["be2"][0])

    f = jnp.maximum(x @ p["w1_t"] + p["b1"][0], 0.0) @ p["w2_t"] + p["b2"][0]
    x = ln(x + f, p["g3"][0], p["be3"][0])
    return x


if __name__ == "__main__":
    B, T, S, D, H, DFF = 2, 8, 8, 32, 4, 64   # batch, tgt seq, mem seq, d_model, heads, ffn
    key = jax.random.PRNGKey(0)
    k_tgt, k_mem, k_par = jax.random.split(key, 3)
    tgt = jax.random.normal(k_tgt, (B, T, D), jnp.float32)
    memory = jax.random.normal(k_mem, (B, S, D), jnp.float32)
    params = init_params(k_par, D, H, DFF)

    # block_rows=8 so the row-tiled kernels exercise a multi-step pipelined grid even
    # at this toy size (production default is chip-dependent: 256 on v7x, 512 on v5e/v6e).
    out = transformer_decoder_layer(tgt, memory, params, num_heads=H, block_rows=8)
    out = jax.block_until_ready(out)

    ref = reference(tgt, memory, params, num_heads=H)
    assert out.shape == (B, T, D)
    assert bool(jnp.all(jnp.isfinite(out)))
    # bf16 MXU operands / bf16 intermediates + approx-reciprocal softmax vs all-f32 ref.
    err = float(jnp.max(jnp.abs(out - ref)))
    assert jnp.allclose(out, ref, atol=5e-2, rtol=5e-2), err
    print("KERNEL_OK")
</pallas_src>

<mosaic_0001>
module attributes {stable_mosaic.version = 11 : i64} {
  func.func @_k(%arg0: i32, %arg1: memref<8x128xf32, #tpu.memory_space<vmem>>, %arg2: memref<8x128xf32, #tpu.memory_space<vmem>>) attributes {dimension_semantics = [#tpu.dimension_semantics<arbitrary>], iteration_bounds = array<i64: 2>, scalar_prefetch = 0 : i64, scratch_operands = 0 : i64, tpu.core_type = #tpu.core_type<tc>, window_params = [{pipeline_mode = #tpu.pipeline_mode<synchronous>, transform_indices = @transform_0, window_bounds = array<i64: 8, 128>}, {pipeline_mode = #tpu.pipeline_mode<synchronous>, transform_indices = @transform_1, window_bounds = array<i64: 8, 128>}]} {
    %c0 = arith.constant 0 : index
    %c0_0 = arith.constant 0 : index
    %0 = vector.load %arg1[%c0, %c0_0] : memref<8x128xf32, #tpu.memory_space<vmem>>, vector<8x128xf32>
    %cst = arith.constant 1.000000e+00 : f32
    %1 = vector.broadcast %cst : f32 to vector<8x128xf32>
    %2 = arith.addf %0, %1 : vector<8x128xf32>
    %c0_1 = arith.constant 0 : index
    %c0_2 = arith.constant 0 : index
    %3 = vector.load %arg2[%c0_1, %c0_2] : memref<8x128xf32, #tpu.memory_space<vmem>>, vector<8x128xf32>
    tpu.vector_store %arg2[%c0_1, %c0_2], %2 {strides = array<i32>} : memref<8x128xf32, #tpu.memory_space<vmem>>, vector<8x128xf32>,
    return
  }
  func.func @transform_0(%arg0: i32) -> (i32, i32) {
    %c0_i32 = arith.constant 0 : i32
    %c0_i32_0 = arith.constant 0 : i32
    %c0_i32_1 = arith.constant 0 : i32
    return %c0_i32, %c0_i32_0 : i32, i32
  }
  func.func @transform_1(%arg0: i32) -> (i32, i32) {
    %c0_i32 = arith.constant 0 : i32
    %c0_i32_0 = arith.constant 0 : i32
    %c0_i32_1 = arith.constant 0 : i32
    return %c0_i32, %c0_i32_0 : i32, i32
  }
}

module attributes {stable_mosaic.version = 11 : i64} {
  func.func @qkv_proj_kernel(%arg0: i32, %arg1: memref<8x32xf32, #tpu.memory_space<vmem>>, %arg2: memref<32x96xbf16, #tpu.memory_space<vmem>>, %arg3: memref<8x32xbf16, #tpu.memory_space<vmem>>, %arg4: memref<8x32xbf16, #tpu.memory_space<vmem>>, %arg5: memref<8x32xbf16, #tpu.memory_space<vmem>>) attributes {dimension_semantics = [#tpu.dimension_semantics<parallel>], iteration_bounds = array<i64: 2>, scalar_prefetch = 0 : i64, scratch_operands = 0 : i64, tpu.core_type = #tpu.core_type<tc>, window_params = [{transform_indices = @transform_0, window_bounds = array<i64: 8, 32>}, {pipeline_mode = #tpu.pipeline_mode<synchronous>, transform_indices = @transform_1, window_bounds = array<i64: 32, 96>}, {transform_indices = @transform_2, window_bounds = array<i64: 8, 32>}, {transform_indices = @transform_3, window_bounds = array<i64: 8, 32>}, {transform_indices = @transform_4, window_bounds = array<i64: 8, 32>}]} {
    %c0 = arith.constant 0 : index
    %c0_0 = arith.constant 0 : index
    %0 = vector.load %arg1[%c0, %c0_0] : memref<8x32xf32, #tpu.memory_space<vmem>>, vector<8x32xf32>
    %1 = arith.truncf %0 : vector<8x32xf32> to vector<8x32xbf16>
    %c0_1 = arith.constant 0 : index
    %c0_2 = arith.constant 0 : index
    %2 = vector.load %arg2[%c0_1, %c0_2] : memref<32x96xbf16, #tpu.memory_space<vmem>>, vector<32x96xbf16>
    %cst = arith.constant dense<0.000000e+00> : vector<8x96xf32>
    %3 = tpu.matmul %1, %2, %cst {dimension_numbers = #tpu.dot_dimension_numbers<[1], [0], [0], [1], [0, 0, 1, 1], [], []>} : vector<8x32xbf16>, vector<32x96xbf16>, vector<8x96xf32> -> vector<8x96xf32>
    %4 = vector.extract_strided_slice %3 {offsets = [0, 0], sizes = [8, 32], strides = [1, 1]} : vector<8x96xf32> to vector<8x32xf32>
    %5 = arith.truncf %4 : vector<8x32xf32> to vector<8x32xbf16>
    %c0_3 = arith.constant 0 : index
    %c0_4 = arith.constant 0 : index
    %6 = vector.load %arg3[%c0_3, %c0_4] : memref<8x32xbf16, #tpu.memory_space<vmem>>, vector<8x32xbf16>
    tpu.vector_store %arg3[%c0_3, %c0_4], %5 {strides = array<i32>} : memref<8x32xbf16, #tpu.memory_space<vmem>>, vector<8x32xbf16>,
    %7 = vector.extract_strided_slice %3 {offsets = [0, 32], sizes = [8, 32], strides = [1, 1]} : vector<8x96xf32> to vector<8x32xf32>
    %8 = arith.truncf %7 : vector<8x32xf32> to vector<8x32xbf16>
    %c0_5 = arith.constant 0 : index
    %c0_6 = arith.constant 0 : index
    %9 = vector.load %arg4[%c0_5, %c0_6] : memref<8x32xbf16, #tpu.memory_space<vmem>>, vector<8x32xbf16>
    tpu.vector_store %arg4[%c0_5, %c0_6], %8 {strides = array<i32>} : memref<8x32xbf16, #tpu.memory_space<vmem>>, vector<8x32xbf16>,
    %10 = vector.extract_strided_slice %3 {offsets = [0, 64], sizes = [8, 32], strides = [1, 1]} : vector<8x96xf32> to vector<8x32xf32>
    %11 = arith.truncf %10 : vector<8x32xf32> to vector<8x32xbf16>
    %c0_7 = arith.constant 0 : index
    %c0_8 = arith.constant 0 : index
    %12 = vector.load %arg5[%c0_7, %c0_8] : memref<8x32xbf16, #tpu.memory_space<vmem>>, vector<8x32xbf16>
    tpu.vector_store %arg5[%c0_7, %c0_8], %11 {strides = array<i32>} : memref<8x32xbf16, #tpu.memory_space<vmem>>, vector<8x32xbf16>,
    return
  }
  func.func @transform_0(%arg0: i32) -> (i32, i32) {
    %c0_i32 = arith.constant 0 : i32
    %c0_i32_0 = arith.constant 0 : i32
    return %arg0, %c0_i32 : i32, i32
  }
  func.func @transform_1(%arg0: i32) -> (i32, i32) {
    %c0_i32 = arith.constant 0 : i32
    %c0_i32_0 = arith.constant 0 : i32
    %c0_i32_1 = arith.constant 0 : i32
    return %c0_i32, %c0_i32_0 : i32, i32
  }
  func.func @transform_2(%arg0: i32) -> (i32, i32) {
    %c0_i32 = arith.constant 0 : i32
    %c0_i32_0 = arith.constant 0 : i32
    return %arg0, %c0_i32 : i32, i32
  }
  func.func @transform_3(%arg0: i32) -> (i32, i32) {
    %c0_i32 = arith.constant 0 : i32
    %c0_i32_0 = arith.constant 0 : i32
    return %arg0, %c0_i32 : i32, i32
  }
  func.func @transform_4(%arg0: i32) -> (i32, i32) {
    %c0_i32 = arith.constant 0 : i32
    %c0_i32_0 = arith.constant 0 : i32
    return %arg0, %c0_i32 : i32, i32
  }
}

</mosaic_0001>

<llo_original>
// kernel: tpu_custom_call.1
$region0: #{tpu_custom_call.1}
  #allocation0 [shape = 'u32[]', space=smem, size = 0x4, offset = 0x4, fixed_abs, tag = 'smem constant byte address 0x4 - core index']
  #allocation1 [shape = 'u32[144,128]{1,0:T(1,128)}', space=vmem, size = 0x12000, scoped, tag = 'internal scratch']
  %s0 = inlined_call_operand.hbm [shape: f32[8,128], index: 0, kind: input, shape index: {}]
  %s1 = inlined_call_operand.hbm [shape: f32[8,128], index: 1, kind: output, shape index: {}]
  %s2 = sld [smem:[#allocation0]]
  $region41: #{tpu_custom_call.1} parent=0
    _
  %s4 = ssub.s32 1, %s2
  %s5 = scalar_select 0, %s4, %s2
  $region1: #{tpu_custom_call.1} parent=0
    #allocation2 [shape = 'u8[4096]{0}', space=vmem, size = 0x1000, scoped, tag = 'input window, operand 0, single buffered']
    #allocation3 [shape = 's32[2]{0}', space=sflag, size = 0x8, scoped, tag = 'scoped memory for tpu_custom_call.1']
    #allocation4 [shape = 's32[2]{0}', space=sflag, size = 0x8, scoped, tag = 'scoped memory for tpu_custom_call.1']
    #allocation5 [shape = 'u8[4096]{0}', space=vmem, size = 0x1000, scoped, tag = 'output window, operand 0, single buffered']
    %6 = vsyncpa [#allocation3], 0
    %7 = vsyncpa [#allocation4], 0
    loop: start=0, step=1, limit=4
    $region2: #{tpu_custom_call.1} parent=1 // loop_pre_header
      _
    $region3: #{tpu_custom_call.1} parent=1 // loop_header
      %s9 = sphi 0, %s13
      %p10 = scmp.ge.s32.totalorder %s9, 4
      %s17 = sphi 0, %s17
      %s19 = sphi 0, %s17
      %s20 = sphi 0, %s19
      %s34 = sphi 0, %s20
      %s38 = sphi 0, %s38
      %s40 = sphi 0, %s38
      %s41 = sphi 0, %s40
      %s55 = sphi 0, %s41
    $region4: #{tpu_custom_call.1} parent=1 // loop_header_branch
      %12 = sbr.rel (%p10) target = $region8
    $region5: #{tpu_custom_call.1} parent=1 // loop_body
      %s14 = ssub.s32 %s9, 1
      %s15 = ssub.s32 %s9, 2
      %s16 = sadd.s32 %s9, 1
      %s18 = sadd.s32 %s17, 1
      %p21 = scmp.eq.s32.totalorder %s9, 1
      %p22 = scmp.ne.s32.totalorder %s17, %s19
      %p23 = scmp.eq.s32.totalorder %s9, 0
      %p24 = por %p22, %p23
      %p25 = scmp.ne.s32.totalorder %s17, %s19
      %p26 = scmp.eq.s32.totalorder %s14, 1
      %p27 = por %p25, %p26
      %p28 = scmp.ne.s32.totalorder %s19, %s20
      %p29 = scmp.eq.s32.totalorder %s14, 0
      %p30 = por %p28, %p29
      %p31 = scmp.ne.s32.totalorder %s19, %s20
      %p32 = scmp.eq.s32.totalorder %s15, 1
      %p33 = por %p31, %p32
      %p35 = scmp.ne.s32.totalorder %s20, %s34
      %p36 = scmp.eq.s32.totalorder %s15, 0
      %p37 = por %p35, %p36
      %s39 = sadd.s32 %s38, 1
      %p42 = scmp.eq.s32.totalorder %s9, 1
      %p43 = scmp.ne.s32.totalorder %s38, %s40
      %p44 = scmp.eq.s32.totalorder %s9, 0
      %p45 = por %p43, %p44
      %p46 = scmp.ne.s32.totalorder %s38, %s40
      %p47 = scmp.eq.s32.totalorder %s14, 1
      %p48 = por %p46, %p47
      %p49 = scmp.ne.s32.totalorder %s40, %s41
      %p50 = scmp.eq.s32.totalorder %s14, 0
      %p51 = por %p49, %p50
      %p52 = scmp.ne.s32.totalorder %s40, %s41
      %p53 = scmp.eq.s32.totalorder %s15, 1
      %p54 = por %p52, %p53
      %p56 = scmp.ne.s32.totalorder %s41, %s55
      %p57 = scmp.eq.s32.totalorder %s15, 0
      %p58 = por %p56, %p57
      %p59 = scmp.le.s32.totalorder 1, %s9
      %p60 = scmp.lt.s32.totalorder %s9, 3
      %p61 = pnand %p59, %p60
      %p62 = pneg %p61
      // Predicated region
      $region9: #{tpu_custom_call.1} parent=5 // pred_check
        _
      $region10: #{tpu_custom_call.1} parent=5 // pred_check_branch
        %64 = sbr.rel (%p61) target = $region12
      $region11: #{tpu_custom_call.1} parent=5 // pred_region
        %s65 = ssub.s32 %s9, 1
        // Predicated region
        $region13: #{tpu_custom_call.1} parent=11 // pred_check
          %p66 = pneg %p30
        $region14: #{tpu_custom_call.1} parent=11 // pred_check_branch
          %68 = sbr.rel (%p66) target = $region16
        $region15: #{tpu_custom_call.1} parent=11 // pred_region
          %s70 = ssub.s32 128, 128
          %71 = vsyncadd [#allocation3], %s70
          %s73 = sshll.u32 [#allocation2], 4
          %s74 = int_to_ptr.vmem [resolvable:$true] %s73
          %76 = dma.hbm_to_vmem [thread:$0]  %s0, 128, %s74, [#allocation3]
        $region16: #{tpu_custom_call.1} parent=11 // pred_fallthru
          _
      $region12: #{tpu_custom_call.1} parent=5 // pred_fallthru
        _
      %p77 = scmp.lt.s32.totalorder %s9, 2
      // Predicated region
      $region17: #{tpu_custom_call.1} parent=5 // pred_check
        %p78 = pneg %p77
      $region18: #{tpu_custom_call.1} parent=5 // pred_check_branch
        %80 = sbr.rel (%p78) target = $region20
      $region19: #{tpu_custom_call.1} parent=5 // pred_region
        _
      $region20: #{tpu_custom_call.1} parent=5 // pred_fallthru
        _
      %p81 = scmp.le.s32.totalorder 1, %s9
      %p82 = scmp.lt.s32.totalorder %s9, 3
      %p83 = pnand %p81, %p82
      %p84 = pneg %p83
      // Predicated region
      $region21: #{tpu_custom_call.1} parent=5 // pred_check
        _
      $region22: #{tpu_custom_call.1} parent=5 // pred_check_branch
        %86 = sbr.rel (%p83) target = $region24
      $region23: #{tpu_custom_call.1} parent=5 // pred_region
        %s87 = ssub.s32 %s9, 1
        // Predicated region
        $region25: #{tpu_custom_call.1} parent=23 // pred_check
          %p88 = pneg %p30
        $region26: #{tpu_custom_call.1} parent=23 // pred_check_branch
          %90 = sbr.rel (%p88) target = $region28
        $region27: #{tpu_custom_call.1} parent=23 // pred_region
          %91 = dma.done [#allocation3], 128
        $region28: #{tpu_custom_call.1} parent=23 // pred_fallthru
          _
        %p92 = pneg %p30
        %p93 = pneg %p27
        %p94 = pneg %p51
        %p95 = pneg %p48
        %v96 = vld [vmem:[#allocation2] sm:$0xff]
        %v97 = vadd.f32 %v96, 1.0
        %98 = vst [vmem:[#allocation5] sm:$0xff] %v97
        // Predicated region
        $region29: #{tpu_custom_call.1} parent=23 // pred_check
          %p99 = pneg %p48
        $region30: #{tpu_custom_call.1} parent=23 // pred_check_branch
          %101 = sbr.rel (%p99) target = $region32
        $region31: #{tpu_custom_call.1} parent=23 // pred_region
          %s103 = ssub.s32 128, 128
          %104 = vsyncadd [#allocation4], %s103
          %s106 = sshll.u32 [#allocation5], 4
          %s107 = int_to_ptr.vmem [resolvable:$true] %s106
          %109 = dma.vmem_to_hbm [thread:$0]  %s107, 128, %s1, [#allocation4]
        $region32: #{tpu_custom_call.1} parent=23 // pred_fallthru
          _
        // Predicated region
        $region33: #{tpu_custom_call.1} parent=23 // pred_check
          %p110 = pneg %p48
        $region34: #{tpu_custom_call.1} parent=23 // pred_check_branch
          %112 = sbr.rel (%p110) target = $region36
        $region35: #{tpu_custom_call.1} parent=23 // pred_region
          %113 = dma.done [#allocation4], 128
        $region36: #{tpu_custom_call.1} parent=23 // pred_fallthru
          _
      $region24: #{tpu_custom_call.1} parent=5 // pred_fallthru
        _
      %p114 = scmp.le.s32.totalorder 2, %s9
      // Predicated region
      $region37: #{tpu_custom_call.1} parent=5 // pred_check
        %p115 = pneg %p114
      $region38: #{tpu_custom_call.1} parent=5 // pred_check_branch
        %117 = sbr.rel (%p115) target = $region40
      $region39: #{tpu_custom_call.1} parent=5 // pred_region
        %s118 = ssub.s32 %s9, 2
      $region40: #{tpu_custom_call.1} parent=5 // pred_fallthru
        _
    $region6: #{tpu_custom_call.1} parent=1 // loop_footer
      %s13 = sadd.s32 1, %s9
    $region7: #{tpu_custom_call.1} parent=1 // loop_footer_branch
      %8 = sbr.rel target = $region3
    $region8: #{tpu_custom_call.1} parent=1 // loop_exit
      _
    %119 = vsyncpa [#allocation3], 1
    %s120 = scalar_lea.sflag [#allocation3], 1
    %121 = vsyncpa %s120, 1
    %122 = vsyncpa [#allocation4], 1
    %s123 = scalar_lea.sflag [#allocation4], 1
    %124 = vsyncpa %s123, 1

// kernel: tpu_custom_call.1
$region0: #{tpu_custom_call.1}
  #allocation0 [shape = 'u32[]', space=smem, size = 0x4, offset = 0x4, fixed_abs, tag = 'smem constant byte address 0x4 - core index']
  #allocation1 [shape = 'u32[144,128]{1,0:T(1,128)}', space=vmem, size = 0x12000, scoped, tag = 'internal scratch']
  %s0 = inlined_call_operand.hbm [shape: f32[16,32], index: 0, kind: input, shape index: {}]
  %s1 = inlined_call_operand.hbm [shape: bf16[32,96], index: 1, kind: input, shape index: {}]
  %s2 = inlined_call_operand.hbm [shape: bf16[16,32], index: 2, kind: output, shape index: {0}]
  %s3 = inlined_call_operand.hbm [shape: bf16[16,32], index: 3, kind: output, shape index: {1}]
  %s4 = inlined_call_operand.hbm [shape: bf16[16,32], index: 4, kind: output, shape index: {2}]
  %5 = xla_tuple %s2, %s3, %s4
  %s6 = sld [smem:[#allocation0]]
  $region65: #{tpu_custom_call.1} parent=0
    _
  %s8 = ssub.s32 1, %s6
  %s9 = scalar_select 0, %s8, %s6
  $region1: #{tpu_custom_call.1} parent=0
    #allocation2 [shape = 'u8[8192]{0}', space=vmem, size = 0x2000, scoped, tag = 'input window, operand 0']
    #allocation3 [shape = 's32[2]{0}', space=sflag, size = 0x8, scoped, tag = 'scoped memory for tpu_custom_call.1']
    #allocation4 [shape = 's32[2]{0}', space=sflag, size = 0x8, scoped, tag = 'scoped memory for tpu_custom_call.1']
    #allocation5 [shape = 'u8[8192]{0}', space=vmem, size = 0x2000, scoped, tag = 'input window, operand 1, single buffered']
    #allocation6 [shape = 's32[1]{0}', space=sflag, size = 0x4, scoped, tag = 'scoped memory for tpu_custom_call.1']
    #allocation7 [shape = 'u8[4096]{0}', space=vmem, size = 0x1000, scoped, tag = 'output window, operand 0']
    #allocation8 [shape = 'u8[4096]{0}', space=vmem, size = 0x1000, scoped, tag = 'output window, operand 1']
    #allocation9 [shape = 's32[2]{0}', space=sflag, size = 0x8, scoped, tag = 'scoped memory for tpu_custom_call.1']
    #allocation10 [shape = 'u8[4096]{0}', space=vmem, size = 0x1000, scoped, tag = 'output window, operand 2']
    %10 = vsyncpa [#allocation3], 0
    %s11 = scalar_lea.sflag [#allocation3], 1
    %12 = vsyncpa %s11, 0
    %13 = vsyncpa [#allocation6], 0
    %14 = vsyncpa [#allocation4], 0
    %s15 = scalar_lea.sflag [#allocation4], 1
    %16 = vsyncpa %s15, 0
    %17 = vsyncpa [#allocation9], 0
    %s18 = scalar_lea.sflag [#allocation9], 1
    %19 = vsyncpa %s18, 0
    loop: start=0, step=1, limit=4
    $region2: #{tpu_custom_call.1} parent=1 // loop_pre_header
      _
    $region3: #{tpu_custom_call.1} parent=1 // loop_header
      %s21 = sphi 0, %s25
      %p22 = scmp.ge.s32.totalorder %s21, 4
      %s31 = sphi 0, %s33
      %s34 = sphi 0, %s31
      %s35 = sphi 0, %s34
      %s51 = sphi 0, %s35
      %s55 = sphi 0, %s55
      %s57 = sphi 0, %s55
      %s58 = sphi 0, %s57
      %s72 = sphi 0, %s58
      %s78 = sphi 0, %s80
      %s81 = sphi 0, %s78
      %s82 = sphi 0, %s81
      %s98 = sphi 0, %s82
      %s104 = sphi 0, %s106
      %s107 = sphi 0, %s104
      %s108 = sphi 0, %s107
      %s124 = sphi 0, %s108
      %s130 = sphi 0, %s132
      %s133 = sphi 0, %s130
      %s134 = sphi 0, %s133
      %s150 = sphi 0, %s134
    $region4: #{tpu_custom_call.1} parent=1 // loop_header_branch
      %24 = sbr.rel (%p22) target = $region8
    $region5: #{tpu_custom_call.1} parent=1 // loop_body
      %s26 = ssub.s32 %s21, 1
      %s27 = ssub.s32 %s21, 2
      %s28 = sadd.s32 %s21, 1
      %s29 = ssub.s32 %s21, %s28
      %p30 = scmp.eq.s32.totalorder %s29, 0
      %s32 = sadd.s32 %s31, 1
      %s33 = scalar_select %p30, %s31, %s32
      %p36 = pneg %p30
      %p37 = scmp.eq.s32.totalorder %s21, 1
      %p38 = por %p36, %p37
      %p39 = scmp.ne.s32.totalorder %s31, %s34
      %p40 = scmp.eq.s32.totalorder %s21, 0
      %p41 = por %p39, %p40
      %p42 = scmp.ne.s32.totalorder %s31, %s34
      %p43 = scmp.eq.s32.totalorder %s26, 1
      %p44 = por %p42, %p43
      %p45 = scmp.ne.s32.totalorder %s34, %s35
      %p46 = scmp.eq.s32.totalorder %s26, 0
      %p47 = por %p45, %p46
      %p48 = scmp.ne.s32.totalorder %s34, %s35
      %p49 = scmp.eq.s32.totalorder %s27, 1
      %p50 = por %p48, %p49
      %p52 = scmp.ne.s32.totalorder %s35, %s51
      %p53 = scmp.eq.s32.totalorder %s27, 0
      %p54 = por %p52, %p53
      %s56 = sadd.s32 %s55, 1
      %p59 = scmp.eq.s32.totalorder %s21, 1
      %p60 = scmp.ne.s32.totalorder %s55, %s57
      %p61 = scmp.eq.s32.totalorder %s21, 0
      %p62 = por %p60, %p61
      %p63 = scmp.ne.s32.totalorder %s55, %s57
      %p64 = scmp.eq.s32.totalorder %s26, 1
      %p65 = por %p63, %p64
      %p66 = scmp.ne.s32.totalorder %s57, %s58
      %p67 = scmp.eq.s32.totalorder %s26, 0
      %p68 = por %p66, %p67
      %p69 = scmp.ne.s32.totalorder %s57, %s58
      %p70 = scmp.eq.s32.totalorder %s27, 1
      %p71 = por %p69, %p70
      %p73 = scmp.ne.s32.totalorder %s58, %s72
      %p74 = scmp.eq.s32.totalorder %s27, 0
      %p75 = por %p73, %p74
      %s76 = ssub.s32 %s21, %s28
      %p77 = scmp.eq.s32.totalorder %s76, 0
      %s79 = sadd.s32 %s78, 1
      %s80 = scalar_select %p77, %s78, %s79
      %p83 = pneg %p77
      %p84 = scmp.eq.s32.totalorder %s21, 1
      %p85 = por %p83, %p84
      %p86 = scmp.ne.s32.totalorder %s78, %s81
      %p87 = scmp.eq.s32.totalorder %s21, 0
      %p88 = por %p86, %p87
      %p89 = scmp.ne.s32.totalorder %s78, %s81
      %p90 = scmp.eq.s32.totalorder %s26, 1
      %p91 = por %p89, %p90
      %p92 = scmp.ne.s32.totalorder %s81, %s82
      %p93 = scmp.eq.s32.totalorder %s26, 0
      %p94 = por %p92, %p93
      %p95 = scmp.ne.s32.totalorder %s81, %s82
      %p96 = scmp.eq.s32.totalorder %s27, 1
      %p97 = por %p95, %p96
      %p99 = scmp.ne.s32.totalorder %s82, %s98
      %p100 = scmp.eq.s32.totalorder %s27, 0
      %p101 = por %p99, %p100
      %s102 = ssub.s32 %s21, %s28
      %p103 = scmp.eq.s32.totalorder %s102, 0
      %s105 = sadd.s32 %s104, 1
      %s106 = scalar_select %p103, %s104, %s105
      %p109 = pneg %p103
      %p110 = scmp.eq.s32.totalorder %s21, 1
      %p111 = por %p109, %p110
      %p112 = scmp.ne.s32.totalorder %s104, %s107
      %p113 = scmp.eq.s32.totalorder %s21, 0
      %p114 = por %p112, %p113
      %p115 = scmp.ne.s32.totalorder %s104, %s107
      %p116 = scmp.eq.s32.totalorder %s26, 1
      %p117 = por %p115, %p116
      %p118 = scmp.ne.s32.totalorder %s107, %s108
      %p119 = scmp.eq.s32.totalorder %s26, 0
      %p120 = por %p118, %p119
      %p121 = scmp.ne.s32.totalorder %s107, %s108
      %p122 = scmp.eq.s32.totalorder %s27, 1
      %p123 = por %p121, %p122
      %p125 = scmp.ne.s32.totalorder %s108, %s124
      %p126 = scmp.eq.s32.totalorder %s27, 0
      %p127 = por %p125, %p126
      %s128 = ssub.s32 %s21, %s28
      %p129 = scmp.eq.s32.totalorder %s128, 0
      %s131 = sadd.s32 %s130, 1
      %s132 = scalar_select %p129, %s130, %s131
      %p135 = pneg %p129
      %p136 = scmp.eq.s32.totalorder %s21, 1
      %p137 = por %p135, %p136
      %p138 = scmp.ne.s32.totalorder %s130, %s133
      %p139 = scmp.eq.s32.totalorder %s21, 0
      %p140 = por %p138, %p139
      %p141 = scmp.ne.s32.totalorder %s130, %s133
      %p142 = scmp.eq.s32.totalorder %s26, 1
      %p143 = por %p141, %p142
      %p144 = scmp.ne.s32.totalorder %s133, %s134
      %p145 = scmp.eq.s32.totalorder %s26, 0
      %p146 = por %p144, %p145
      %p147 = scmp.ne.s32.totalorder %s133, %s134
      %p148 = scmp.eq.s32.totalorder %s27, 1
      %p149 = por %p147, %p148
      %p151 = scmp.ne.s32.totalorder %s134, %s150
      %p152 = scmp.eq.s32.totalorder %s27, 0
      %p153 = por %p151, %p152
      %p154 = scmp.le.s32.totalorder 1, %s21
      %p155 = scmp.lt.s32.totalorder %s21, 3
      %p156 = pnand %p154, %p155
      %p157 = pneg %p156
      // Predicated region
      $region9: #{tpu_custom_call.1} parent=5 // pred_check
        _
      $region10: #{tpu_custom_call.1} parent=5 // pred_check_branch
        %159 = sbr.rel (%p156) target = $region12
      $region11: #{tpu_custom_call.1} parent=5 // pred_region
        %s160 = ssub.s32 %s21, 1
        // Predicated region
        $region13: #{tpu_custom_call.1} parent=11 // pred_check
          %p161 = pneg %p68
        $region14: #{tpu_custom_call.1} parent=11 // pred_check_branch
          %163 = sbr.rel (%p161) target = $region16
        $region15: #{tpu_custom_call.1} parent=11 // pred_region
          %s165 = ssub.s32 256, 256
          %166 = vsyncadd [#allocation6], %s165
          %s167 = sshll.u32 [#allocation5], 4
          %s168 = int_to_ptr.vmem [resolvable:$true] %s167
          %173 = dma.hbm_to_vmem [thread:$0]  %s1, 256, %s168, [#allocation6], 64, 64, 4
        $region16: #{tpu_custom_call.1} parent=11 // pred_fallthru
          _
      $region12: #{tpu_custom_call.1} parent=5 // pred_fallthru
        _
      %p174 = scmp.lt.s32.totalorder %s21, 2
      // Predicated region
      $region17: #{tpu_custom_call.1} parent=5 // pred_check
        %p175 = pneg %p174
      $region18: #{tpu_custom_call.1} parent=5 // pred_check_branch
        %177 = sbr.rel (%p175) target = $region20
      $region19: #{tpu_custom_call.1} parent=5 // pred_region
        // Predicated region
        $region21: #{tpu_custom_call.1} parent=19 // pred_check
          %p178 = pneg %p41
        $region22: #{tpu_custom_call.1} parent=19 // pred_check_branch
          %180 = sbr.rel (%p178) target = $region24
        $region23: #{tpu_custom_call.1} parent=19 // pred_region
          %s181 = sand.u32 %s31, 1
          %s182 = scalar_lea.sflag [#allocation3], %s181
          %s183 = sand.u32 %s31, 1
          %s184 = smul.addr %s183, 8
          %s185 = scalar_lea.vmem [#allocation2], %s184
          %s187 = ssub.s32 128, 128
          %188 = vsyncadd %s182, %s187
          %s189 = smul.addr %s21, 128
          %s190 = scalar_lea.hbm %s0, %s189
          %s192 = sshll.u32 %s185, 4
          %s193 = int_to_ptr.vmem [resolvable:$true] %s192
          %195 = dma.hbm_to_vmem [thread:$0]  %s190, 128, %s193, %s182
        $region24: #{tpu_custom_call.1} parent=19 // pred_fallthru
          _
      $region20: #{tpu_custom_call.1} parent=5 // pred_fallthru
        _
      %p196 = scmp.le.s32.totalorder 1, %s21
      %p197 = scmp.lt.s32.totalorder %s21, 3
      %p198 = pnand %p196, %p197
      %p199 = pneg %p198
      // Predicated region
      $region25: #{tpu_custom_call.1} parent=5 // pred_check
        _
      $region26: #{tpu_custom_call.1} parent=5 // pred_check_branch
        %201 = sbr.rel (%p198) target = $region28
      $region27: #{tpu_custom_call.1} parent=5 // pred_region
        %s202 = ssub.s32 %s21, 1
        %s203 = sand.u32 %s34, 1
        %s204 = scalar_lea.sflag [#allocation3], %s203
        %s205 = sand.u32 %s34, 1
        %s206 = smul.addr %s205, 8
        %s207 = scalar_lea.vmem [#allocation2], %s206
        // Predicated region
        $region29: #{tpu_custom_call.1} parent=27 // pred_check
          %p208 = pneg %p47
        $region30: #{tpu_custom_call.1} parent=27 // pred_check_branch
          %210 = sbr.rel (%p208) target = $region32
        $region31: #{tpu_custom_call.1} parent=27 // pred_region
          %211 = dma.done %s204, 128
        $region32: #{tpu_custom_call.1} parent=27 // pred_fallthru
          _
        // Predicated region
        $region33: #{tpu_custom_call.1} parent=27 // pred_check
          %p212 = pneg %p68
        $region34: #{tpu_custom_call.1} parent=27 // pred_check_branch
          %214 = sbr.rel (%p212) target = $region36
        $region35: #{tpu_custom_call.1} parent=27 // pred_region
          %215 = dma.done [#allocation6], 256
        $region36: #{tpu_custom_call.1} parent=27 // pred_fallthru
          _
        %s216 = sand.u32 %s34, 1
        %s217 = scalar_lea.sflag [#allocation3], %s216
        %s218 = sand.u32 %s34, 1
        %s219 = smul.addr %s218, 8
        %s220 = scalar_lea.vmem [#allocation2], %s219
        %p221 = pneg %p47
        %p222 = pneg %p44
        %p223 = pneg %p68
        %p224 = pneg %p65
        %p225 = pneg %p94
        %p226 = pneg %p91
        %s227 = sand.u32 %s81, 1
        %s228 = scalar_lea.sflag [#allocation4], %s227
        %s229 = sand.u32 %s81, 1
        %s230 = smul.addr %s229, 4
        %s231 = scalar_lea.vmem [#allocation7], %s230
        %p232 = pneg %p120
        %p233 = pneg %p117
        %s234 = sand.u32 %s26, 1
        %s235 = scalar_lea.sflag [#allocation9], %s234
        %s236 = sand.u32 %s107, 1
        %s237 = smul.addr %s236, 4
        %s238 = scalar_lea.vmem [#allocation8], %s237
        %p239 = pneg %p146
        %p240 = pneg %p143
        %s241 = sand.u32 %s26, 1
        %s242 = scalar_lea.sflag [#allocation9], %s241
        %s243 = sand.u32 %s133, 1
        %s244 = smul.addr %s243, 4
        %s245 = scalar_lea.vmem [#allocation10], %s244
        %v247 = vld [vmem:[%s207] sm:$0xff]
        %v248 = vpack.c.bf16 %v247, %v247
        %v249 = vld [vmem:[#allocation5] sm:$0xf]
        %v250 = vld [vmem:[#allocation5 + $0x4] sm:$0xf]
        %v251 = vld [vmem:[#allocation5 + $0x8] sm:$0xf]
        %v252 = vld [vmem:[#allocation5 + $0xc] sm:$0xf]
        %v257 = vunpack.c.l.b16 %v249
        %v258 = vunpack.c.l.b16 %v250
        %v259 = vunpack.c.l.b16 %v251
        %v260 = vunpack.c.l.b16 %v252
        %v261 = vpack.c.b16 %v258, %v257
        %v262 = vpack.c.b16 %v260, %v259
        %vm265 = vcmask 261120
        %v267 = vsel %vm265, %v248, 0
        %269 = vmatprep.subr.bf16.mxu0 0
        %270 = vmatpush1.bf16.msra.mxu0 0
        %271 = vmatprep.subr.bf16.mxu0 0
        %272 = vmatpush1.bf16.msra.mxu0 0
        %273 = vmatprep.subr.bf16.mxu0 0
        %274 = vmatpush1.bf16.msra.mxu0 0
        %275 = vmatprep.subr.bf16.mxu0 0
        %276 = vmatpush1.bf16.msra.mxu0 0
        %277 = vmatprep.subr.bf16.mxu0 0
        %278 = vmatpush1.bf16.msra.mxu0 0
        %279 = vmatprep.subr.bf16.mxu0 0
        %280 = vmatpush1.bf16.msra.mxu0 0
        %281 = vmatprep.subr.bf16.mxu0 0
        %282 = vmatpush1.bf16.msra.mxu0 %v262
        %283 = vmatprep.subr.bf16.mxu0 0
        %284 = vmatpush1.bf16.msra.mxu0 %v261
        %285 = vmatprep.subr.bf16.mxu0 0
        %286 = vmatpush2.bf16.msra.mxu0 0
        %287 = vmatprep.subr.bf16.mxu0 0
        %288 = vmatpush2.bf16.msra.mxu0 0
        %289 = vmatprep.subr.bf16.mxu0 0
        %290 = vmatpush2.bf16.msra.mxu0 0
        %291 = vmatprep.subr.bf16.mxu0 0
        %292 = vmatpush2.bf16.msra.mxu0 0
        %293 = vmatprep.subr.bf16.mxu0 0
        %294 = vmatpush2.bf16.msra.mxu0 0
        %295 = vmatprep.subr.bf16.mxu0 0
        %296 = vmatpush2.bf16.msra.mxu0 0
        %297 = vmatprep.subr.bf16.mxu0 0
        %298 = vmatpush2.bf16.msra.mxu0 0
        %299 = vmatprep.subr.bf16.mxu0 0
        %300 = vmatpush2.bf16.msra.mxu0 0
        %301 = vmatprep.mubr.bf16.mxu0 0
        %302 = vmatmul.mubr.bf16.gmra.mxu0 %v267
        %v303 = vpop.f32.mrf.mxu0
        %v304 = vadd.f32 0.0, %v303
        %v305 = vpop.f32.mrf.mxu0
        %v306 = vpop.f32.mrf.mxu0
        %v307 = vpop.f32.mrf.mxu0
        %308 = vdwg.mxu0
        %v309 = vpack.c.bf16 %v304, %v304
        %vm310 = vcmask 257024
        %311 = vst.msk [vmem:[%s231] sm:$0xf] %vm310, %v309
        %v313 = vunpack.c.l.b16 %v309
        %v314 = vpack.c.b16 %v313, %v313
        %315 = vrot.lane.b32.xlu0 %v314, 96
        %v316 = vpop.permute.xlu0 %315
        %318 = vst.msk [vmem:[%s238] sm:$0xf] %vm310, %v316
        %319 = vrot.lane.b32.xlu0 %v314, 64
        %v320 = vpop.permute.xlu0 %319
        %322 = vst.msk [vmem:[%s245] sm:$0xf] %vm310, %v320
        %s323 = sand.u32 %s81, 1
        %s324 = scalar_lea.sflag [#allocation4], %s323
        %s325 = sand.u32 %s81, 1
        %s326 = smul.addr %s325, 4
        %s327 = scalar_lea.vmem [#allocation7], %s326
        %s328 = sand.u32 %s26, 1
        %s329 = scalar_lea.sflag [#allocation9], %s328
        %s330 = sand.u32 %s107, 1
        %s331 = smul.addr %s330, 4
        %s332 = scalar_lea.vmem [#allocation8], %s331
        %s333 = sand.u32 %s26, 1
        %s334 = scalar_lea.sflag [#allocation9], %s333
        %s335 = sand.u32 %s133, 1
        %s336 = smul.addr %s335, 4
        %s337 = scalar_lea.vmem [#allocation10], %s336
        // Predicated region
        $region37: #{tpu_custom_call.1} parent=27 // pred_check
          %p338 = pneg %p91
        $region38: #{tpu_custom_call.1} parent=27 // pred_check_branch
          %340 = sbr.rel (%p338) target = $region40
        $region39: #{tpu_custom_call.1} parent=27 // pred_region
          %s342 = ssub.s32 64, 64
          %343 = vsyncadd %s324, %s342
          %s344 = smul.addr %s26, 64
          %s345 = scalar_lea.hbm %s2, %s344
          %s347 = sshll.u32 %s327, 4
          %s348 = int_to_ptr.vmem [resolvable:$true] %s347
          %350 = dma.vmem_to_hbm [thread:$0]  %s348, 64, %s345, %s324
        $region40: #{tpu_custom_call.1} parent=27 // pred_fallthru
          _
        // Predicated region
        $region41: #{tpu_custom_call.1} parent=27 // pred_check
          %p351 = pneg %p117
        $region42: #{tpu_custom_call.1} parent=27 // pred_check_branch
          %353 = sbr.rel (%p351) target = $region44
        $region43: #{tpu_custom_call.1} parent=27 // pred_region
          %s355 = ssub.s32 64, 64
          %356 = vsyncadd %s329, %s355
          %s357 = smul.addr %s26, 64
          %s358 = scalar_lea.hbm %s3, %s357
          %s360 = sshll.u32 %s332, 4
          %s361 = int_to_ptr.vmem [resolvable:$true] %s360
          %363 = dma.vmem_to_hbm [thread:$0]  %s361, 64, %s358, %s329
        $region44: #{tpu_custom_call.1} parent=27 // pred_fallthru
          _
        // Predicated region
        $region45: #{tpu_custom_call.1} parent=27 // pred_check
          %p364 = pneg %p143
        $region46: #{tpu_custom_call.1} parent=27 // pred_check_branch
          %366 = sbr.rel (%p364) target = $region48
        $region47: #{tpu_custom_call.1} parent=27 // pred_region
          %s368 = ssub.s32 64, 64
          %369 = vsyncadd %s334, %s368
          %s370 = smul.addr %s26, 64
          %s371 = scalar_lea.hbm %s4, %s370
          %s373 = sshll.u32 %s337, 4
          %s374 = int_to_ptr.vmem [resolvable:$true] %s373
          %376 = dma.vmem_to_hbm [thread:$0]  %s374, 64, %s371, %s334
        $region48: #{tpu_custom_call.1} parent=27 // pred_fallthru
          _
      $region28: #{tpu_custom_call.1} parent=5 // pred_fallthru
        _
      %p377 = scmp.le.s32.totalorder 2, %s21
      // Predicated region
      $region49: #{tpu_custom_call.1} parent=5 // pred_check
        %p378 = pneg %p377
      $region50: #{tpu_custom_call.1} parent=5 // pred_check_branch
        %380 = sbr.rel (%p378) target = $region52
      $region51: #{tpu_custom_call.1} parent=5 // pred_region
        %s381 = ssub.s32 %s21, 2
        // Predicated region
        $region53: #{tpu_custom_call.1} parent=51 // pred_check
          %p382 = pneg %p97
        $region54: #{tpu_custom_call.1} parent=51 // pred_check_branch
          %384 = sbr.rel (%p382) target = $region56
        $region55: #{tpu_custom_call.1} parent=51 // pred_region
          %s385 = sand.u32 %s82, 1
          %s386 = scalar_lea.sflag [#allocation4], %s385
          %s387 = sand.u32 %s82, 1
          %s388 = smul.addr %s387, 4
          %s389 = scalar_lea.vmem [#allocation7], %s388
          %390 = dma.done %s386, 64
        $region56: #{tpu_custom_call.1} parent=51 // pred_fallthru
          _
        // Predicated region
        $region57: #{tpu_custom_call.1} parent=51 // pred_check
          %p391 = pneg %p123
        $region58: #{tpu_custom_call.1} parent=51 // pred_check_branch
          %393 = sbr.rel (%p391) target = $region60
        $region59: #{tpu_custom_call.1} parent=51 // pred_region
          %s394 = sand.u32 %s27, 1
          %s395 = scalar_lea.sflag [#allocation9], %s394
          %s396 = sand.u32 %s108, 1
          %s397 = smul.addr %s396, 4
          %s398 = scalar_lea.vmem [#allocation8], %s397
          %399 = dma.done %s395, 64
        $region60: #{tpu_custom_call.1} parent=51 // pred_fallthru
          _
        // Predicated region
        $region61: #{tpu_custom_call.1} parent=51 // pred_check
          %p400 = pneg %p149
        $region62: #{tpu_custom_call.1} parent=51 // pred_check_branch
          %402 = sbr.rel (%p400) target = $region64
        $region63: #{tpu_custom_call.1} parent=51 // pred_region
          %s403 = sand.u32 %s27, 1
          %s404 = scalar_lea.sflag [#allocation9], %s403
          %s405 = sand.u32 %s134, 1
          %s406 = smul.addr %s405, 4
          %s407 = scalar_lea.vmem [#allocation10], %s406
          %408 = dma.done %s404, 64
        $region64: #{tpu_custom_call.1} parent=51 // pred_fallthru
          _
      $region52: #{tpu_custom_call.1} parent=5 // pred_fallthru
        _
    $region6: #{tpu_custom_call.1} parent=1 // loop_footer
      %s25 = sadd.s32 1, %s21
    $region7: #{tpu_custom_call.1} parent=1 // loop_footer_branch
      %20 = sbr.rel target = $region3
    $region8: #{tpu_custom_call.1} parent=1 // loop_exit
      _
    %409 = vsyncpa [#allocation3], 1
    %s410 = scalar_lea.sflag [#allocation3], 1
    %411 = vsyncpa %s410, 1
    %412 = vsyncpa [#allocation6], 1
    %413 = vsyncpa [#allocation4], 1
    %s414 = scalar_lea.sflag [#allocation4], 1
    %415 = vsyncpa %s414, 1
    %416 = vsyncpa [#allocation9], 1
    %s417 = scalar_lea.sflag [#allocation9], 1
    %418 = vsyncpa %s417, 1

</llo_original>
